<compile_context>
chip_gen: v6e
topology: v6e:2x2x1
jax: 0.10.0
libtpu: 0.0.40
codegen_flags: <defaults>
</compile_context>

<pallas_src>
import numpy as np
import jax
import jax.numpy as jnp
from jax import lax
from jax.experimental import pallas as pl
from jax.experimental.pallas import tpu as pltpu


# --------------------------- tiled linear kernel ---------------------------

def _linear_kernel(x_ref, w_ref, b_ref, o_ref, acc_ref):
    k = pl.program_id(2)

    @pl.when(k == 0)
    def _init():
        acc_ref[...] = jnp.zeros_like(acc_ref)

    acc_ref[...] += jnp.dot(x_ref[...], w_ref[...],
                            preferred_element_type=jnp.float32)

    @pl.when(k == pl.num_programs(2) - 1)
    def _finalize():
        o_ref[...] = (acc_ref[...] + b_ref[...].astype(jnp.float32)
                      ).astype(o_ref.dtype)


def _choose_block(dim, target, gran):
    """Largest multiple-of-`gran` divisor of `dim` that is <= target, else full dim."""
    if dim <= target:
        return dim
    t = (target // gran) * gran
    while t >= gran:
        if dim % t == 0:
            return t
        t -= gran
    return dim


def pallas_linear(x2d, w, b2d, out_dtype, *, tm=512, tn=256, tk=1024):
    """x2d: (M, K), w: (K, N), b2d: (1, N) fp32 -> (M, N) in out_dtype.

    Tiled (M, N, K) grid, fp32 VMEM accumulator; MXU operands keep x2d/w dtype.
    Larger default tiles amortize the per-grid-step overhead and keep the
    2x256x256 MXUs (v6e/v7x) fed; still only a few MB of VMEM per step."""
    M, K = x2d.shape
    Kw, N = w.shape
    assert K == Kw
    tm = _choose_block(M, tm, 128)
    tn = _choose_block(N, tn, 128)
    tk = _choose_block(K, tk, 128)
    grid = (M // tm, N // tn, K // tk)
    return pl.pallas_call(
        _linear_kernel,
        out_shape=jax.ShapeDtypeStruct((M, N), out_dtype),
        grid=grid,
        in_specs=[
            pl.BlockSpec((tm, tk), lambda i, j, k: (i, k)),
            pl.BlockSpec((tk, tn), lambda i, j, k: (k, j)),
            pl.BlockSpec((1, tn), lambda i, j, k: (0, j)),
        ],
        out_specs=pl.BlockSpec((tm, tn), lambda i, j, k: (i, j)),
        scratch_shapes=[pltpu.VMEM((tm, tn), jnp.float32)],
        compiler_params=pltpu.CompilerParams(
            dimension_semantics=("parallel", "parallel", "arbitrary")),
    )(x2d, w, b2d)


# ------------------------- relative attention kernel ----------------------

def _attn_vmem_limit():
    """Per-generation scoped VMEM budget for the attention kernel
    (~75% of physical: ~96 MiB on v5e/v6e, ~48 MiB on v7x)."""
    try:
        cap = pltpu.get_tpu_info().vmem_capacity_bytes
        return min(int(cap * 0.75), 100 * 1024 * 1024)
    except Exception:
        return 48 * 1024 * 1024


def _rel_attn_kernel(q_ref, kv_ref, ekT_ref, ev_ref, bias_ref, o_ref):
    # q_ref:  (1, Tq, HDh or 3*HDh) query rows (native projection layout)
    # kv_ref: (1, L, 3*HDh)         full-length rows; K/V sliced in-register
    # ekT:    (Dh, R); ev: (R, Dh); bias: (1, 1, L) additive (0 / -1e30)
    # o_ref:  (1, Tq, H*Dh)
    Tq = q_ref.shape[1]
    L = kv_ref.shape[1]
    Dh, R = ekT_ref.shape
    HDh = kv_ref.shape[2] // 3
    H = HDh // Dh
    P = (R - 1) // 2
    dot_dtype = q_ref.dtype
    scale = np.float32(1.0 / np.sqrt(Dh))
    q0 = pl.program_id(1) * Tq

    # Split Q/K/V and heads in-register (static lane slices + major-dim
    # transposes) -- no HBM transpose of the projection output.
    q_rows = q_ref[0]                                            # (Tq, >=HDh)
    kv_rows = kv_ref[0]                                          # (L, 3*HDh)
    q2d = q_rows[:, :HDh].astype(jnp.float32) * scale            # fold 1/sqrt(Dh)
    q_split = q2d.astype(dot_dtype).reshape(Tq, H, Dh)           # (Tq, H, Dh)
    q = jnp.transpose(q_split, (1, 0, 2))                        # (H, Tq, Dh)
    k = jnp.transpose(kv_rows[:, HDh:2 * HDh].reshape(L, H, Dh), (1, 0, 2))
    v = jnp.transpose(kv_rows[:, 2 * HDh:].reshape(L, H, Dh), (1, 0, 2))

    # Content-content scores: MXU, batched over heads.
    s = jnp.einsum('hqd,hkd->hqk', q, k,
                   preferred_element_type=jnp.float32)           # (H, Tq, L) f32

    # Content-position scores: qe = Q @ emb_K^T (MXU), then ONE batched MXU
    # contraction against an in-register one-hot of the clipped relative
    # distance.  No (R, L, L) HBM band tensor, no R-deep VPU loop.
    qe = jnp.dot(q_split.reshape(Tq * H, Dh), ekT_ref[...],
                 preferred_element_type=jnp.float32).reshape(Tq, H, R)

    q_ids = lax.broadcasted_iota(jnp.int32, (Tq, L, R), 0) + q0
    k_ids = lax.broadcasted_iota(jnp.int32, (Tq, L, R), 1)
    r_ids = lax.broadcasted_iota(jnp.int32, (Tq, L, R), 2)
    rel = jnp.clip(k_ids - q_ids, -P, P) + P
    onehot = (rel == r_ids).astype(dot_dtype)                    # (Tq, L, R)

    s2 = jnp.einsum('qhr,qkr->qhk', qe.astype(dot_dtype), onehot,
                    preferred_element_type=jnp.float32)          # (Tq, H, L)
    s = s + jnp.transpose(s2, (1, 0, 2))

    # Additive key mask (0 / -1e30) and numerically stable softmax, all fp32.
    # TODO(synk): with full key masking this gives uniform (not NaN) rows,
    # unlike the reference's -inf softmax; fine for valid inputs.
    s = s + bias_ref[0]
    m = jnp.max(s, axis=-1, keepdims=True)
    p = jnp.exp(s - m)
    a = p * pl.reciprocal(jnp.sum(p, axis=-1, keepdims=True), approx=True)

    # TODO(synk): attention-weight dropout is skipped (inference mode).

    a_lo = a.astype(dot_dtype)
    # Content-value term on the MXU, batched over heads.
    o1 = jnp.einsum('hqk,hkd->hqd', a_lo, v,
                    preferred_element_type=jnp.float32)          # (H, Tq, Dh)

    # Position-value term: bucket-sum attention probs with the same one-hot
    # (one batched MXU contraction), then one (Tq*H, R) @ (R, Dh) matmul.
    abuck = jnp.einsum('qhk,qkr->qhr', jnp.transpose(a_lo, (1, 0, 2)), onehot,
                       preferred_element_type=jnp.float32)       # (Tq, H, R)
    o2 = jnp.dot(abuck.reshape(Tq * H, R).astype(dot_dtype), ev_ref[...],
                 preferred_element_type=jnp.float32).reshape(Tq, H, Dh)

    o = jnp.transpose(o1, (1, 0, 2)) + o2                        # (Tq, H, Dh)
    # Single lane-dense store of the whole (Tq, H*Dh) output block.
    o_ref[0] = o.reshape(Tq, HDh).astype(o_ref.dtype)


def pallas_rel_attention(qkv, emb_kT, emb_v, mask_bias, *, n_heads, d_head,
                         q_tile=256):
    """qkv: (B, L, 3*H*Dh) in compute dtype (native projection layout);
    emb_kT: (Dh, R); emb_v: (R, Dh) (compute dtype); mask_bias: (B, 1, L) f32.
    Returns (B, L, H*Dh) in qkv.dtype."""
    B, L, threeHDh = qkv.shape
    HDh = n_heads * d_head
    assert threeHDh == 3 * HDh
    Dh, R = emb_kT.shape
    Tq = _choose_block(L, q_tile, 8)
    grid = (B, L // Tq)

    # When H*Dh is lane-aligned we can DMA only the Q columns of the q-tile
    # block; otherwise fall back to the full 3*H*Dh width (demo shapes).
    q_cols = HDh if HDh % 128 == 0 else threeHDh

    # TODO(synk): for very long L, add a k-tile grid axis with an online-softmax
    # accumulator (flash-style); here the full-L key block per q-tile suffices.
    return pl.pallas_call(
        _rel_attn_kernel,
        out_shape=jax.ShapeDtypeStruct((B, L, HDh), qkv.dtype),
        grid=grid,
        in_specs=[
            pl.BlockSpec((1, Tq, q_cols), lambda b, qi: (b, qi, 0)),     # Q rows
            pl.BlockSpec((1, L, threeHDh), lambda b, qi: (b, 0, 0)),     # K/V rows
            pl.BlockSpec((Dh, R), lambda b, qi: (0, 0)),
            pl.BlockSpec((R, Dh), lambda b, qi: (0, 0)),
            pl.BlockSpec((1, 1, L), lambda b, qi: (b, 0, 0)),
        ],
        out_specs=pl.BlockSpec((1, Tq, HDh), lambda b, qi: (b, qi, 0)),
        compiler_params=pltpu.CompilerParams(
            dimension_semantics=("parallel", "parallel"),
            vmem_limit_bytes=_attn_vmem_limit()),
    )(qkv, qkv, emb_kT, emb_v, mask_bias)


# ------------------------------ full forward ------------------------------

def multi_head_self_attention(x, mask, params, n_heads, max_pos_distance,
                              compute_dtype=jnp.bfloat16):
    """x: (B, L, input_size) f32, mask: (B, L) int (1 = keep, 0 = mask out)."""
    B, L, Din = x.shape
    w_in, b_in = params["w_in"], params["b_in"]
    w_out, b_out = params["w_out"], params["b_out"]
    emb_k, emb_v = params["emb_k"], params["emb_v"]
    output_size = w_out.shape[1]
    H = n_heads
    Dh = output_size // n_heads

    # Input projection: tiled Pallas matmul, low-precision operands, fp32 accum.
    qkv = pallas_linear(x.reshape(B * L, Din).astype(compute_dtype),
                        w_in.astype(compute_dtype), b_in,
                        out_dtype=compute_dtype)                 # (B*L, 3*H*Dh)
    qkv = qkv.reshape(B, L, 3 * H * Dh)                          # no HBM transpose

    # Compact positional tables + additive key mask (tiny host-side prep).
    mask_bias = (1.0 - mask.astype(jnp.float32)).reshape(B, 1, L) * jnp.float32(-1e30)
    emb_kT = jnp.transpose(emb_k).astype(compute_dtype)          # (Dh, R)
    emb_v_c = emb_v.astype(compute_dtype)                        # (R, Dh)

    # Fused attention core: grid over (batch, q-tile), all heads batched.
    attn = pallas_rel_attention(qkv, emb_kT, emb_v_c, mask_bias,
                                n_heads=H, d_head=Dh)            # (B, L, H*Dh)

    # Output projection back to fp32.
    out = pallas_linear(attn.reshape(B * L, output_size),
                        w_out.astype(compute_dtype), b_out,
                        out_dtype=jnp.float32)
    return out.reshape(B, L, output_size)


# ------------------------------ JAX reference ------------------------------

def reference_forward(x, mask, params, n_heads, max_pos_distance):
    B, L, _ = x.shape
    w_in, b_in = params["w_in"], params["b_in"]
    w_out, b_out = params["w_out"], params["b_out"]
    emb_k, emb_v = params["emb_k"], params["emb_v"]
    output_size = w_out.shape[1]
    d_head = output_size // n_heads

    qkv = x @ w_in + b_in[0]
    Q, K, V = jnp.split(qkv, 3, axis=-1)

    def rs(t):
        return jnp.transpose(t.reshape(B, L, n_heads, d_head), (0, 2, 1, 3))

    Q, K, V = rs(Q), rs(K), rs(V)
    idx = jnp.arange(L)
    rel = jnp.clip(idx[None, :] - idx[:, None],
                   -max_pos_distance, max_pos_distance) + max_pos_distance
    pek, pev = emb_k[rel], emb_v[rel]

    S1 = jnp.einsum("bhid,bhjd->bhij", Q, K)
    S2 = jnp.einsum("bhid,ijd->bhij", Q, pek)
    S = (S1 + S2) / np.float32(np.sqrt(d_head))
    S = jnp.where(mask[:, None, None, :] == 0, -jnp.inf, S)
    A = jax.nn.softmax(S, axis=-1)
    O1 = jnp.einsum("bhij,bhjd->bhid", A, V)
    O2 = jnp.einsum("bhij,ijd->bhid", A, pev)
    O = jnp.transpose(O1 + O2, (0, 2, 1, 3)).reshape(B, L, output_size)
    return O @ w_out + b_out[0]


# ---------------------------------- main -----------------------------------

if __name__ == "__main__":
    B, L = 2, 8
    input_size, output_size, n_heads, max_pos = 32, 32, 4, 4
    d_head = output_size // n_heads

    key = jax.random.PRNGKey(0)
    ks = jax.random.split(key, 8)
    params = dict(
        w_in=0.05 * jax.random.normal(ks[0], (input_size, 3 * output_size), jnp.float32),
        b_in=0.05 * jax.random.normal(ks[1], (1, 3 * output_size), jnp.float32),
        w_out=0.05 * jax.random.normal(ks[2], (output_size, output_size), jnp.float32),
        b_out=0.05 * jax.random.normal(ks[3], (1, output_size), jnp.float32),
        emb_k=0.05 * jax.random.normal(ks[4], (2 * max_pos + 1, d_head), jnp.float32),
        emb_v=0.05 * jax.random.normal(ks[5], (2 * max_pos + 1, d_head), jnp.float32),
    )
    x = jax.random.normal(ks[6], (B, L, input_size), jnp.float32)
    lengths = jnp.array([L, L - 3])
    mask = (jnp.arange(L)[None, :] < lengths[:, None]).astype(jnp.int32)   # (B, L)

    ref = reference_forward(x, mask, params, n_heads, max_pos)

    # fp32 operand path (sanity check of the restructured math; only the
    # approximate reciprocal differs from exact arithmetic).
    out_f32 = multi_head_self_attention(x, mask, params, n_heads, max_pos,
                                        compute_dtype=jnp.float32)
    out_f32 = jax.block_until_ready(out_f32)
    np.testing.assert_allclose(np.asarray(out_f32), np.asarray(ref),
                               rtol=2e-2, atol=5e-3)

    # bf16 operand path (the optimized configuration).
    out_bf16 = multi_head_self_attention(x, mask, params, n_heads, max_pos,
                                         compute_dtype=jnp.bfloat16)
    out_bf16 = jax.block_until_ready(out_bf16)
    np.testing.assert_allclose(np.asarray(out_bf16), np.asarray(ref),
                               rtol=5e-2, atol=2e-2)

    print("KERNEL_OK")
</pallas_src>

<mosaic_0001>
module attributes {stable_mosaic.version = 11 : i64} {
  func.func @_linear_kernel(%arg0: i32, %arg1: i32, %arg2: i32, %arg3: memref<16x32xf32, #tpu.memory_space<vmem>>, %arg4: memref<32x96xf32, #tpu.memory_space<vmem>>, %arg5: memref<1x96xf32, #tpu.memory_space<vmem>>, %arg6: memref<16x96xf32, #tpu.memory_space<vmem>>, %arg7: memref<16x96xf32, #tpu.memory_space<vmem>>) attributes {dimension_semantics = [#tpu.dimension_semantics<parallel>, #tpu.dimension_semantics<parallel>, #tpu.dimension_semantics<arbitrary>], iteration_bounds = array<i64: 1, 1, 1>, scalar_prefetch = 0 : i64, scratch_operands = 1 : i64, tpu.core_type = #tpu.core_type<tc>, window_params = [{transform_indices = @transform_0, window_bounds = array<i64: 16, 32>}, {transform_indices = @transform_1, window_bounds = array<i64: 32, 96>}, {transform_indices = @transform_2, window_bounds = array<i64: 1, 96>}, {transform_indices = @transform_3, window_bounds = array<i64: 16, 96>}]} {
    %c0_i32 = arith.constant 0 : i32
    %0 = arith.cmpi eq, %arg2, %c0_i32 : i32
    %1 = arith.extui %0 : i1 to i32
    %c0_i32_0 = arith.constant 0 : i32
    %2 = arith.cmpi ne, %1, %c0_i32_0 : i32
    scf.if %2 {
      %cst_10 = arith.constant 0.000000e+00 : f32
      %12 = vector.broadcast %cst_10 : f32 to vector<16x96xf32>
      %c0_11 = arith.constant 0 : index
      %c0_12 = arith.constant 0 : index
      %13 = vector.load %arg7[%c0_11, %c0_12] : memref<16x96xf32, #tpu.memory_space<vmem>>, vector<16x96xf32>
      tpu.vector_store %arg7[%c0_11, %c0_12], %12 {strides = array<i32>} : memref<16x96xf32, #tpu.memory_space<vmem>>, vector<16x96xf32>,
    } else {
    }
    %c0 = arith.constant 0 : index
    %c0_1 = arith.constant 0 : index
    %3 = vector.load %arg7[%c0, %c0_1] : memref<16x96xf32, #tpu.memory_space<vmem>>, vector<16x96xf32>
    %c0_2 = arith.constant 0 : index
    %c0_3 = arith.constant 0 : index
    %4 = vector.load %arg3[%c0_2, %c0_3] : memref<16x32xf32, #tpu.memory_space<vmem>>, vector<16x32xf32>
    %c0_4 = arith.constant 0 : index
    %c0_5 = arith.constant 0 : index
    %5 = vector.load %arg4[%c0_4, %c0_5] : memref<32x96xf32, #tpu.memory_space<vmem>>, vector<32x96xf32>
    %cst = arith.constant dense<0.000000e+00> : vector<16x96xf32>
    %6 = tpu.matmul %4, %5, %cst {dimension_numbers = #tpu.dot_dimension_numbers<[1], [0], [0], [1], [0, 0, 1, 1], [], []>} : vector<16x32xf32>, vector<32x96xf32>, vector<16x96xf32> -> vector<16x96xf32>
    %7 = arith.addf %3, %6 : vector<16x96xf32>
    %c0_6 = arith.constant 0 : index
    %c0_7 = arith.constant 0 : index
    %8 = vector.load %arg7[%c0_6, %c0_7] : memref<16x96xf32, #tpu.memory_space<vmem>>, vector<16x96xf32>
    tpu.vector_store %arg7[%c0_6, %c0_7], %7 {strides = array<i32>} : memref<16x96xf32, #tpu.memory_space<vmem>>, vector<16x96xf32>,
    %c0_i32_8 = arith.constant 0 : i32
    %9 = arith.cmpi eq, %arg2, %c0_i32_8 : i32
    %10 = arith.extui %9 : i1 to i32
    %c0_i32_9 = arith.constant 0 : i32
    %11 = arith.cmpi ne, %10, %c0_i32_9 : i32
    scf.if %11 {
      %c0_10 = arith.constant 0 : index
      %c0_11 = arith.constant 0 : index
      %12 = vector.load %arg7[%c0_10, %c0_11] : memref<16x96xf32, #tpu.memory_space<vmem>>, vector<16x96xf32>
      %c0_12 = arith.constant 0 : index
      %c0_13 = arith.constant 0 : index
      %13 = vector.load %arg5[%c0_12, %c0_13] : memref<1x96xf32, #tpu.memory_space<vmem>>, vector<1x96xf32>
      %14 = vector.broadcast %13 : vector<1x96xf32> to vector<16x96xf32>
      %15 = arith.addf %12, %14 : vector<16x96xf32>
      %c0_14 = arith.constant 0 : index
      %c0_15 = arith.constant 0 : index
      %16 = vector.load %arg6[%c0_14, %c0_15] : memref<16x96xf32, #tpu.memory_space<vmem>>, vector<16x96xf32>
      tpu.vector_store %arg6[%c0_14, %c0_15], %15 {strides = array<i32>} : memref<16x96xf32, #tpu.memory_space<vmem>>, vector<16x96xf32>,
    } else {
    }
    return
  }
  func.func @transform_0(%arg0: i32, %arg1: i32, %arg2: i32) -> (i32, i32) {
    %c0_i32 = arith.constant 0 : i32
    return %arg0, %arg2 : i32, i32
  }
  func.func @transform_1(%arg0: i32, %arg1: i32, %arg2: i32) -> (i32, i32) {
    %c0_i32 = arith.constant 0 : i32
    return %arg2, %arg1 : i32, i32
  }
  func.func @transform_2(%arg0: i32, %arg1: i32, %arg2: i32) -> (i32, i32) {
    %c0_i32 = arith.constant 0 : i32
    %c0_i32_0 = arith.constant 0 : i32
    return %c0_i32, %arg1 : i32, i32
  }
  func.func @transform_3(%arg0: i32, %arg1: i32, %arg2: i32) -> (i32, i32) {
    %c0_i32 = arith.constant 0 : i32
    return %arg0, %arg1 : i32, i32
  }
}

</mosaic_0001>

<llo_original>
// kernel: tpu_custom_call.1
$region0: #{tpu_custom_call.1}
  #allocation0 [shape = 'u32[]', space=smem, size = 0x4, offset = 0x4, fixed_abs, tag = 'smem constant byte address 0x4 - core index']
  #allocation1 [shape = 'u32[144,128]{1,0:T(1,128)}', space=vmem, size = 0x12000, scoped, tag = 'internal scratch']
  #allocation2 [shape = 'f32[16,96]{1,0:T(8,128)}', space=vmem, size = 0x2000, scoped, tag = 'scratch operand']
  %s0 = inlined_call_operand.hbm [shape: f32[16,32], index: 0, kind: input, shape index: {}]
  %s1 = inlined_call_operand.hbm [shape: f32[32,96], index: 1, kind: input, shape index: {}]
  %s2 = inlined_call_operand.vmem [shape: f32[1,96], index: 2, kind: input, shape index: {}]
  %s3 = inlined_call_operand.hbm [shape: f32[16,96], index: 3, kind: output, shape index: {}]
  %s4 = sld [smem:[#allocation0]]
  $region38: #{tpu_custom_call.1} parent=0
    _
  %s6 = ssub.s32 1, %s4
  %s7 = scalar_select 0, %s6, %s4
  $region1: #{tpu_custom_call.1} parent=0
    #allocation3 [shape = 'u8[8192]{0}', space=vmem, size = 0x2000, scoped, tag = 'input window, operand 0, single buffered']
    #allocation4 [shape = 's32[1]{0}', space=sflag, size = 0x4, scoped, tag = 'scoped memory for tpu_custom_call.1']
    #allocation5 [shape = 's32[1]{0}', space=sflag, size = 0x4, scoped, tag = 'scoped memory for tpu_custom_call.1']
    #allocation6 [shape = 'u8[16384]{0}', space=vmem, size = 0x4000, scoped, tag = 'input window, operand 1, single buffered']
    #allocation7 [shape = 's32[1]{0}', space=sflag, size = 0x4, scoped, tag = 'scoped memory for tpu_custom_call.1']
    #allocation8 [shape = 'u8[8192]{0}', space=vmem, size = 0x2000, scoped, tag = 'output window, operand 0, single buffered']
    %8 = vsyncpa [#allocation4], 0
    %9 = vsyncpa [#allocation7], 0
    %10 = vsyncpa [#allocation5], 0
    // Predicated region
    $region2: #{tpu_custom_call.1} parent=1 // pred_check
      _
    $region3: #{tpu_custom_call.1} parent=1 // pred_check_branch
      %12 = sbr.rel (0) target = $region5
    $region4: #{tpu_custom_call.1} parent=1 // pred_region
      %s14 = ssub.s32 256, 256
      %15 = vsyncadd [#allocation4], %s14
      %s16 = sshll.u32 [#allocation3], 4
      %s17 = int_to_ptr.vmem [resolvable:$true] %s16
      %22 = dma.hbm_to_vmem [thread:$0]  %s0, 256, %s17, [#allocation4], 128, 128, 8
    $region5: #{tpu_custom_call.1} parent=1 // pred_fallthru
      _
    // Predicated region
    $region6: #{tpu_custom_call.1} parent=1 // pred_check
      _
    $region7: #{tpu_custom_call.1} parent=1 // pred_check_branch
      %24 = sbr.rel (0) target = $region9
    $region8: #{tpu_custom_call.1} parent=1 // pred_region
      %s26 = ssub.s32 512, 512
      %27 = vsyncadd [#allocation7], %s26
      %s28 = sshll.u32 [#allocation6], 4
      %s29 = int_to_ptr.vmem [resolvable:$true] %s28
      %34 = dma.hbm_to_vmem [thread:$0]  %s1, 512, %s29, [#allocation7], 128, 128, 8
    $region9: #{tpu_custom_call.1} parent=1 // pred_fallthru
      _
    // Predicated region
    $region10: #{tpu_custom_call.1} parent=1 // pred_check
      _
    $region11: #{tpu_custom_call.1} parent=1 // pred_check_branch
      %36 = sbr.rel (0) target = $region13
    $region12: #{tpu_custom_call.1} parent=1 // pred_region
      _
    $region13: #{tpu_custom_call.1} parent=1 // pred_fallthru
      _
    // Predicated region
    $region14: #{tpu_custom_call.1} parent=1 // pred_check
      _
    $region15: #{tpu_custom_call.1} parent=1 // pred_check_branch
      %38 = sbr.rel (0) target = $region17
    $region16: #{tpu_custom_call.1} parent=1 // pred_region
      %39 = dma.done [#allocation4], 256
    $region17: #{tpu_custom_call.1} parent=1 // pred_fallthru
      _
    // Predicated region
    $region18: #{tpu_custom_call.1} parent=1 // pred_check
      _
    $region19: #{tpu_custom_call.1} parent=1 // pred_check_branch
      %41 = sbr.rel (0) target = $region21
    $region20: #{tpu_custom_call.1} parent=1 // pred_region
      %42 = dma.done [#allocation7], 512
    $region21: #{tpu_custom_call.1} parent=1 // pred_fallthru
      _
    %p43 = scmp.eq.s32.totalorder 0, 0
    // Predicated region
    $region22: #{tpu_custom_call.1} parent=1 // pred_check
      %p44 = pneg %p43
    $region23: #{tpu_custom_call.1} parent=1 // pred_check_branch
      %46 = sbr.rel (%p44) target = $region25
    $region24: #{tpu_custom_call.1} parent=1 // pred_region
      %vm47 = vcmask 785408
      %48 = vst.msk [vmem:[#allocation2] sm:$0xff] %vm47, 0.0
      %49 = vst.msk [vmem:[#allocation2 + $0x8] sm:$0xff] %vm47, 0.0
    $region25: #{tpu_custom_call.1} parent=1 // pred_fallthru
      _
    %v50 = vld [vmem:[#allocation2] sm:$0xff]
    %v51 = vld [vmem:[#allocation2 + $0x8] sm:$0xff]
    %v52 = vld [vmem:[#allocation3] sm:$0xff]
    %v53 = vld [vmem:[#allocation3 + $0x8] sm:$0xff]
    %v54 = vld [vmem:[#allocation6] sm:$0xff]
    %v55 = vld [vmem:[#allocation6 + $0x8] sm:$0xff]
    %v56 = vld [vmem:[#allocation6 + $0x10] sm:$0xff]
    %v57 = vld [vmem:[#allocation6 + $0x18] sm:$0xff]
    %vm58 = vcmask 261120
    %v60 = vsel %vm58, %v52, 0
    %v63 = vsel %vm58, %v53, 0
    %65 = vmatprep.subr.mxu0 0.0
    %66 = vmatpush1.msra.mxu0 0.0
    %67 = vmatprep.subr.mxu0 0.0
    %68 = vmatpush1.msra.mxu0 0.0
    %69 = vmatprep.subr.mxu0 0.0
    %70 = vmatpush1.msra.mxu0 0.0
    %71 = vmatprep.subr.mxu0 0.0
    %72 = vmatpush1.msra.mxu0 0.0
    %73 = vmatprep.subr.mxu0 0.0
    %74 = vmatpush1.msra.mxu0 0.0
    %75 = vmatprep.subr.mxu0 0.0
    %76 = vmatpush1.msra.mxu0 0.0
    %77 = vmatprep.subr.mxu0 0.0
    %78 = vmatpush1.msra.mxu0 0.0
    %79 = vmatprep.subr.mxu0 0.0
    %80 = vmatpush1.msra.mxu0 0.0
    %81 = vmatprep.subr.mxu0 0.0
    %82 = vmatpush1.msra.mxu0 0.0
    %83 = vmatprep.subr.mxu0 0.0
    %84 = vmatpush1.msra.mxu0 0.0
    %85 = vmatprep.subr.mxu0 0.0
    %86 = vmatpush1.msra.mxu0 0.0
    %87 = vmatprep.subr.mxu0 0.0
    %88 = vmatpush1.msra.mxu0 0.0
    %89 = vmatprep.subr.mxu0 0.0
    %90 = vmatpush1.msra.mxu0 %v57
    %91 = vmatprep.subr.mxu0 0.0
    %92 = vmatpush1.msra.mxu0 %v56
    %93 = vmatprep.subr.mxu0 0.0
    %94 = vmatpush1.msra.mxu0 %v55
    %95 = vmatprep.subr.mxu0 0.0
    %96 = vmatpush1.msra.mxu0 %v54
    %97 = vmatprep.subr.mxu0 0.0
    %98 = vmatpush2.msra.mxu0 0.0
    %99 = vmatprep.subr.mxu0 0.0
    %100 = vmatpush2.msra.mxu0 0.0
    %101 = vmatprep.subr.mxu0 0.0
    %102 = vmatpush2.msra.mxu0 0.0
    %103 = vmatprep.subr.mxu0 0.0
    %104 = vmatpush2.msra.mxu0 0.0
    %105 = vmatprep.subr.mxu0 0.0
    %106 = vmatpush2.msra.mxu0 0.0
    %107 = vmatprep.subr.mxu0 0.0
    %108 = vmatpush2.msra.mxu0 0.0
    %109 = vmatprep.subr.mxu0 0.0
    %110 = vmatpush2.msra.mxu0 0.0
    %111 = vmatprep.subr.mxu0 0.0
    %112 = vmatpush2.msra.mxu0 0.0
    %113 = vmatprep.subr.mxu0 0.0
    %114 = vmatpush2.msra.mxu0 0.0
    %115 = vmatprep.subr.mxu0 0.0
    %116 = vmatpush2.msra.mxu0 0.0
    %117 = vmatprep.subr.mxu0 0.0
    %118 = vmatpush2.msra.mxu0 0.0
    %119 = vmatprep.subr.mxu0 0.0
    %120 = vmatpush2.msra.mxu0 0.0
    %121 = vmatprep.subr.mxu0 0.0
    %122 = vmatpush2.msra.mxu0 0.0
    %123 = vmatprep.subr.mxu0 0.0
    %124 = vmatpush2.msra.mxu0 0.0
    %125 = vmatprep.subr.mxu0 0.0
    %126 = vmatpush2.msra.mxu0 0.0
    %127 = vmatprep.subr.mxu0 0.0
    %128 = vmatpush2.msra.mxu0 0.0
    %129 = vmatprep.mubr.f32.mxu0 0.0
    %130 = vmatmul.mubr.f32.gmra.mxu0 %v60
    %v131 = vpop.f32.mrf.mxu0
    %v132 = vadd.f32 0.0, %v131
    %v133 = vpop.f32.mrf.mxu0
    %134 = vmatprep.mubr.f32.mxu0 0.0
    %135 = vmatmul.mubr.f32.gmra.mxu0 %v63
    %v136 = vpop.f32.mrf.mxu0
    %v137 = vadd.f32 0.0, %v136
    %v138 = vpop.f32.mrf.mxu0
    %139 = vdwg.mxu0
    %v140 = vadd.f32 %v50, %v132
    %v141 = vadd.f32 %v51, %v137
    %vm142 = vcmask 785408
    %143 = vst.msk [vmem:[#allocation2] sm:$0xff] %vm142, %v140
    %144 = vst.msk [vmem:[#allocation2 + $0x8] sm:$0xff] %vm142, %v141
    // Predicated region
    $region26: #{tpu_custom_call.1} parent=1 // pred_check
      %p145 = pneg %p43
    $region27: #{tpu_custom_call.1} parent=1 // pred_check_branch
      %147 = sbr.rel (%p145) target = $region29
    $region28: #{tpu_custom_call.1} parent=1 // pred_region
      %v148 = vld [vmem:[#allocation2] sm:$0xff]
      %v149 = vld [vmem:[#allocation2 + $0x8] sm:$0xff]
      %v150 = vld [vmem:[%s2] sm:$0x1]
      %v152 = vlaneseq
      %v153 = vshrl.u32 %v152, 7
      %v154 = vsub.s32 0, %v153
      %v155 = vrot.slane %v150, %v154
      %v157 = vadd.f32 %v148, %v155
      %v158 = vadd.f32 %v149, %v155
      %159 = vst.msk [vmem:[#allocation8] sm:$0xff] %vm142, %v157
      %160 = vst.msk [vmem:[#allocation8 + $0x8] sm:$0xff] %vm142, %v158
    $region29: #{tpu_custom_call.1} parent=1 // pred_fallthru
      _
    // Predicated region
    $region30: #{tpu_custom_call.1} parent=1 // pred_check
      _
    $region31: #{tpu_custom_call.1} parent=1 // pred_check_branch
      %162 = sbr.rel (0) target = $region33
    $region32: #{tpu_custom_call.1} parent=1 // pred_region
      %s164 = ssub.s32 256, 256
      %165 = vsyncadd [#allocation5], %s164
      %s166 = sshll.u32 [#allocation8], 4
      %s167 = int_to_ptr.vmem [resolvable:$true] %s166
      %172 = dma.vmem_to_hbm [thread:$0]  %s167, 256, %s3, [#allocation5], 128, 128, 8
    $region33: #{tpu_custom_call.1} parent=1 // pred_fallthru
      _
    // Predicated region
    $region34: #{tpu_custom_call.1} parent=1 // pred_check
      _
    $region35: #{tpu_custom_call.1} parent=1 // pred_check_branch
      %174 = sbr.rel (0) target = $region37
    $region36: #{tpu_custom_call.1} parent=1 // pred_region
      %175 = dma.done [#allocation5], 256
    $region37: #{tpu_custom_call.1} parent=1 // pred_fallthru
      _
    %176 = vsyncpa [#allocation4], 1
    %177 = vsyncpa [#allocation7], 1
    %178 = vsyncpa [#allocation5], 1

</llo_original>
